<compile_context>
chip_gen: v7x
topology: tpu7x:2x2x1
jax: 0.10.0
libtpu: 0.0.40
codegen_flags: <defaults>
</compile_context>

<pallas_src>
import functools

import jax
import jax.numpy as jnp
from jax.experimental import pallas as pl
from jax.experimental.pallas import tpu as pltpu  # noqa: F401  (TPU backend)


class Config:
    n_head = 2
    d_head = 16
    dropout = 0.0  # nn.Dropout(p=0) == identity


def sdpa_kernel(q_ref, k_ref, v_ref, mask_ref, ctx_ref, prob_ref, *, scale):
    q = q_ref[...]          # (BH, S, Dh) f32
    k = k_ref[...]          # (BH, S, Dh) f32
    v = v_ref[...]          # (BH, S, Dh) f32

    # scores = Q @ K^T, batched over BH, contracting the head dim directly
    # (no explicit transpose -> no XLU layout shuffle).
    scores = jax.lax.dot_general(
        q, k,
        dimension_numbers=(((2,), (2,)), ((0,), (0,))),
        preferred_element_type=jnp.float32)                     # (BH, S, S)
    scores = scores * jnp.float32(scale)

    # masked_fill_(attn_mask, -1e9): masked positions get exactly -1e9.
    scores = jnp.where(mask_ref[...] != 0, jnp.float32(-1e9), scores)

    # softmax over the last axis (f32 throughout).
    m = jnp.max(scores, axis=-1, keepdims=True)
    e = jnp.exp(scores - m)
    prob = e / jnp.sum(e, axis=-1, keepdims=True)               # (BH, S, S)

    # TODO(synk): training-mode dropout (p>0) would use pltpu.prng_seed +
    # pltpu.stateful_bernoulli; identity here since config.dropout == 0 / eval.

    # context = attn_prob @ V, batched over BH.
    ctx = jax.lax.dot_general(
        prob, v,
        dimension_numbers=(((2,), (1,)), ((0,), (0,))),
        preferred_element_type=jnp.float32)                     # (BH, S, Dh)

    ctx_ref[...] = ctx.astype(ctx_ref.dtype)
    prob_ref[...] = prob


def scaled_dot_product_attention(Q, K, V, attn_mask, *, d_head):
    """Q, K, V: (B, H, S, d_head) f32. attn_mask: (B, H, S, S) bool (True = masked)."""
    B, H, S, Dh = Q.shape
    BH = B * H
    scale = 1.0 / (d_head ** 0.5)

    # Fold batch and heads into one leading dim; mask as int32 for the kernel.
    q = Q.reshape(BH, S, Dh)
    k = K.reshape(BH, S, Dh)
    v = V.reshape(BH, S, Dh)
    m = attn_mask.reshape(BH, S, S).astype(jnp.int32)

    ctx, prob = pl.pallas_call(
        functools.partial(sdpa_kernel, scale=scale),
        out_shape=(jax.ShapeDtypeStruct((BH, S, Dh), Q.dtype),
                   jax.ShapeDtypeStruct((BH, S, S), jnp.float32)),
    )(q, k, v, m)

    return ctx.reshape(B, H, S, Dh), prob.reshape(B, H, S, S)


if __name__ == "__main__":
    cfg = Config()
    key = jax.random.PRNGKey(0)
    kq, kk, kv = jax.random.split(key, 3)

    B, H, S, Dh = 2, cfg.n_head, 8, cfg.d_head
    Q = jax.random.normal(kq, (B, H, S, Dh), jnp.float32)
    K = jax.random.normal(kk, (B, H, S, Dh), jnp.float32)
    V = jax.random.normal(kv, (B, H, S, Dh), jnp.float32)

    # Standard GPT causal mask (triu(diagonal=1)): future positions masked,
    # the diagonal (self) is NOT masked. Built once, outside the kernel.
    rows = jnp.arange(S)[:, None]
    cols = jnp.arange(S)[None, :]
    attn_mask = jnp.broadcast_to(cols > rows, (B, H, S, S))

    ctx, prob = scaled_dot_product_attention(Q, K, V, attn_mask, d_head=cfg.d_head)
    ctx = jax.block_until_ready(ctx)
    prob = jax.block_until_ready(prob)

    assert ctx.shape == (B, H, S, Dh)
    assert prob.shape == (B, H, S, S)
    # Rows of attn_prob sum to 1; masked (future) positions get ~zero prob.
    assert bool(jnp.allclose(jnp.sum(prob, axis=-1), 1.0, atol=1e-5))
    assert bool(jnp.all(jnp.where(attn_mask, prob, 0.0) < 1e-6))

    # Pure-JAX reference check.
    scale = 1.0 / (cfg.d_head ** 0.5)
    scores_ref = jnp.einsum("bhqd,bhkd->bhqk", Q, K) * scale
    scores_ref = jnp.where(attn_mask, jnp.float32(-1e9), scores_ref)
    prob_ref = jax.nn.softmax(scores_ref, axis=-1)
    ctx_ref = jnp.einsum("bhqk,bhkd->bhqd", prob_ref, V)
    assert bool(jnp.allclose(prob, prob_ref, atol=1e-4))
    assert bool(jnp.allclose(ctx, ctx_ref, atol=1e-4))

    print("KERNEL_OK")
</pallas_src>

<mosaic_0001>
module attributes {stable_mosaic.version = 11 : i64} {
  func.func @sdpa_kernel(%arg0: memref<4x8x16xf32, #tpu.memory_space<vmem>>, %arg1: memref<4x8x16xf32, #tpu.memory_space<vmem>>, %arg2: memref<4x8x16xf32, #tpu.memory_space<vmem>>, %arg3: memref<4x8x8xi32, #tpu.memory_space<vmem>>, %arg4: memref<4x8x16xf32, #tpu.memory_space<vmem>>, %arg5: memref<4x8x8xf32, #tpu.memory_space<vmem>>) attributes {dimension_semantics = [], scalar_prefetch = 0 : i64, scratch_operands = 0 : i64, tpu.core_type = #tpu.core_type<tc>} {
    %c0 = arith.constant 0 : index
    %c0_0 = arith.constant 0 : index
    %c0_1 = arith.constant 0 : index
    %0 = vector.load %arg0[%c0, %c0_0, %c0_1] : memref<4x8x16xf32, #tpu.memory_space<vmem>>, vector<4x8x16xf32>
    %c0_2 = arith.constant 0 : index
    %c0_3 = arith.constant 0 : index
    %c0_4 = arith.constant 0 : index
    %1 = vector.load %arg1[%c0_2, %c0_3, %c0_4] : memref<4x8x16xf32, #tpu.memory_space<vmem>>, vector<4x8x16xf32>
    %c0_5 = arith.constant 0 : index
    %c0_6 = arith.constant 0 : index
    %c0_7 = arith.constant 0 : index
    %2 = vector.load %arg2[%c0_5, %c0_6, %c0_7] : memref<4x8x16xf32, #tpu.memory_space<vmem>>, vector<4x8x16xf32>
    %cst = arith.constant dense<0.000000e+00> : vector<4x8x8xf32>
    %3 = tpu.matmul %0, %1, %cst {dimension_numbers = #tpu.dot_dimension_numbers<[2], [2], [1], [1], [0, 0, 0, 1, 1, 1], [0], [0]>} : vector<4x8x16xf32>, vector<4x8x16xf32>, vector<4x8x8xf32> -> vector<4x8x8xf32>
    %cst_8 = arith.constant 2.500000e-01 : f32
    %4 = vector.broadcast %cst_8 : f32 to vector<4x8x8xf32>
    %5 = arith.mulf %3, %4 : vector<4x8x8xf32>
    %c0_9 = arith.constant 0 : index
    %c0_10 = arith.constant 0 : index
    %c0_11 = arith.constant 0 : index
    %6 = vector.load %arg3[%c0_9, %c0_10, %c0_11] : memref<4x8x8xi32, #tpu.memory_space<vmem>>, vector<4x8x8xi32>
    %c0_i32 = arith.constant 0 : i32
    %7 = vector.broadcast %c0_i32 : i32 to vector<4x8x8xi32>
    %8 = arith.cmpi ne, %6, %7 : vector<4x8x8xi32>
    %cst_12 = arith.constant -1.000000e+09 : f32
    %9 = vector.broadcast %cst_12 : f32 to vector<4x8x8xf32>
    %10 = arith.select %8, %9, %5 : vector<4x8x8xi1>, vector<4x8x8xf32>
    %cst_13 = arith.constant dense<0xFF800000> : vector<4x8xf32>
    %11 = vector.multi_reduction <maximumf>, %10, %cst_13 [2] : vector<4x8x8xf32> to vector<4x8xf32>
    %12 = vector.shape_cast %11 : vector<4x8xf32> to vector<4x8x1xf32>
    %13 = vector.broadcast %12 : vector<4x8x1xf32> to vector<4x8x8xf32>
    %14 = arith.subf %10, %13 : vector<4x8x8xf32>
    %15 = math.exp %14 : vector<4x8x8xf32>
    %cst_14 = arith.constant dense<0.000000e+00> : vector<4x8xf32>
    %16 = vector.multi_reduction <add>, %15, %cst_14 [2] : vector<4x8x8xf32> to vector<4x8xf32>
    %17 = vector.shape_cast %16 : vector<4x8xf32> to vector<4x8x1xf32>
    %18 = vector.broadcast %17 : vector<4x8x1xf32> to vector<4x8x8xf32>
    %19 = arith.divf %15, %18 : vector<4x8x8xf32>
    %cst_15 = arith.constant dense<0.000000e+00> : vector<4x8x16xf32>
    %20 = tpu.matmul %19, %2, %cst_15 {dimension_numbers = #tpu.dot_dimension_numbers<[2], [1], [1], [2], [0, 0, 0, 1, 1, 2], [0], [0]>} : vector<4x8x8xf32>, vector<4x8x16xf32>, vector<4x8x16xf32> -> vector<4x8x16xf32>
    %c0_16 = arith.constant 0 : index
    %c0_17 = arith.constant 0 : index
    %c0_18 = arith.constant 0 : index
    %21 = vector.load %arg4[%c0_16, %c0_17, %c0_18] : memref<4x8x16xf32, #tpu.memory_space<vmem>>, vector<4x8x16xf32>
    tpu.vector_store %arg4[%c0_16, %c0_17, %c0_18], %20 {strides = array<i32>} : memref<4x8x16xf32, #tpu.memory_space<vmem>>, vector<4x8x16xf32>,
    %c0_19 = arith.constant 0 : index
    %c0_20 = arith.constant 0 : index
    %c0_21 = arith.constant 0 : index
    %22 = vector.load %arg5[%c0_19, %c0_20, %c0_21] : memref<4x8x8xf32, #tpu.memory_space<vmem>>, vector<4x8x8xf32>
    tpu.vector_store %arg5[%c0_19, %c0_20, %c0_21], %19 {strides = array<i32>} : memref<4x8x8xf32, #tpu.memory_space<vmem>>, vector<4x8x8xf32>,
    return
  }
}

</mosaic_0001>

<llo_original>
// kernel: tpu_custom_call.1
$region0: #{tpu_custom_call.1}
  #allocation0 [shape = 'u32[]', space=smem, size = 0x4, offset = 0x4, fixed_abs, tag = 'smem constant byte address 0x4 - core index']
  #allocation1 [shape = 'u32[144,128]{1,0:T(1,128)}', space=vmem, size = 0x12000, scoped, tag = 'internal scratch']
  %s0 = inlined_call_operand.hbm [shape: f32[4,8,16], index: 0, kind: input, shape index: {}]
  %s1 = inlined_call_operand.hbm [shape: f32[4,8,16], index: 1, kind: input, shape index: {}]
  %s2 = inlined_call_operand.hbm [shape: f32[4,8,16], index: 2, kind: input, shape index: {}]
  %s3 = inlined_call_operand.hbm [shape: s32[4,8,8], index: 3, kind: input, shape index: {}]
  %s4 = inlined_call_operand.hbm [shape: f32[4,8,16], index: 4, kind: output, shape index: {0}]
  %s5 = inlined_call_operand.hbm [shape: f32[4,8,8], index: 5, kind: output, shape index: {1}]
  %6 = xla_tuple %s4, %s5
  %s7 = sld [smem:[#allocation0]]
  $region50: #{tpu_custom_call.1} parent=0
    _
  %s9 = ssub.s32 1, %s7
  %s10 = scalar_select 0, %s9, %s7
  $region1: #{tpu_custom_call.1} parent=0
    #allocation2 [shape = 'u8[16384]{0}', space=vmem, size = 0x4000, scoped, tag = 'input window, operand 0, single buffered']
    #allocation3 [shape = 's32[1]{0}', space=sflag, size = 0x4, scoped, tag = 'scoped memory for tpu_custom_call.1']
    #allocation4 [shape = 's32[1]{0}', space=sflag, size = 0x4, scoped, tag = 'scoped memory for tpu_custom_call.1']
    #allocation5 [shape = 'u8[16384]{0}', space=vmem, size = 0x4000, scoped, tag = 'input window, operand 1, single buffered']
    #allocation6 [shape = 's32[1]{0}', space=sflag, size = 0x4, scoped, tag = 'scoped memory for tpu_custom_call.1']
    #allocation7 [shape = 'u8[16384]{0}', space=vmem, size = 0x4000, scoped, tag = 'input window, operand 2, single buffered']
    #allocation8 [shape = 'u8[16384]{0}', space=vmem, size = 0x4000, scoped, tag = 'input window, operand 3, single buffered']
    #allocation9 [shape = 's32[1]{0}', space=sflag, size = 0x4, scoped, tag = 'scoped memory for tpu_custom_call.1']
    #allocation10 [shape = 'u8[16384]{0}', space=vmem, size = 0x4000, scoped, tag = 'output window, operand 0, single buffered']
    #allocation11 [shape = 'u8[16384]{0}', space=vmem, size = 0x4000, scoped, tag = 'output window, operand 1, single buffered']
    #allocation12 [shape = 's32[1]{0}', space=sflag, size = 0x4, scoped, tag = 'scoped memory for tpu_custom_call.1']
    %11 = vsyncpa [#allocation3], 0
    %12 = vsyncpa [#allocation6], 0
    %13 = vsyncpa [#allocation9], 0
    %14 = vsyncpa [#allocation4], 0
    %15 = vsyncpa [#allocation12], 0
    // Predicated region
    $region2: #{tpu_custom_call.1} parent=1 // pred_check
      _
    $region3: #{tpu_custom_call.1} parent=1 // pred_check_branch
      %17 = sbr.rel (0) target = $region5
    $region4: #{tpu_custom_call.1} parent=1 // pred_region
      %s19 = ssub.s32 512, 512
      %20 = vsyncadd [#allocation3], %s19
      %s21 = sshll.u32 [#allocation2], 4
      %s22 = int_to_ptr.vmem [resolvable:$true] %s21
      %27 = dma.hbm_to_vmem [thread:$0]  %s0, 512, %s22, [#allocation3], 128, 128, 8
    $region5: #{tpu_custom_call.1} parent=1 // pred_fallthru
      _
    // Predicated region
    $region6: #{tpu_custom_call.1} parent=1 // pred_check
      _
    $region7: #{tpu_custom_call.1} parent=1 // pred_check_branch
      %29 = sbr.rel (0) target = $region9
    $region8: #{tpu_custom_call.1} parent=1 // pred_region
      %s31 = ssub.s32 512, 512
      %32 = vsyncadd [#allocation6], %s31
      %s33 = sshll.u32 [#allocation5], 4
      %s34 = int_to_ptr.vmem [resolvable:$true] %s33
      %39 = dma.hbm_to_vmem [thread:$0]  %s1, 512, %s34, [#allocation6], 128, 128, 8
    $region9: #{tpu_custom_call.1} parent=1 // pred_fallthru
      _
    // Predicated region
    $region10: #{tpu_custom_call.1} parent=1 // pred_check
      _
    $region11: #{tpu_custom_call.1} parent=1 // pred_check_branch
      %41 = sbr.rel (0) target = $region13
    $region12: #{tpu_custom_call.1} parent=1 // pred_region
      %s43 = ssub.s32 512, 512
      %44 = vsyncadd [#allocation6], %s43
      %s45 = sshll.u32 [#allocation7], 4
      %s46 = int_to_ptr.vmem [resolvable:$true] %s45
      %51 = dma.hbm_to_vmem [thread:$0]  %s2, 512, %s46, [#allocation6], 128, 128, 8
    $region13: #{tpu_custom_call.1} parent=1 // pred_fallthru
      _
    // Predicated region
    $region14: #{tpu_custom_call.1} parent=1 // pred_check
      _
    $region15: #{tpu_custom_call.1} parent=1 // pred_check_branch
      %53 = sbr.rel (0) target = $region17
    $region16: #{tpu_custom_call.1} parent=1 // pred_region
      %s55 = ssub.s32 512, 512
      %56 = vsyncadd [#allocation9], %s55
      %s57 = sshll.u32 [#allocation8], 4
      %s58 = int_to_ptr.vmem [resolvable:$true] %s57
      %63 = dma.hbm_to_vmem [thread:$0]  %s3, 512, %s58, [#allocation9], 128, 128, 8
    $region17: #{tpu_custom_call.1} parent=1 // pred_fallthru
      _
    // Predicated region
    $region18: #{tpu_custom_call.1} parent=1 // pred_check
      _
    $region19: #{tpu_custom_call.1} parent=1 // pred_check_branch
      %65 = sbr.rel (0) target = $region21
    $region20: #{tpu_custom_call.1} parent=1 // pred_region
      %66 = dma.done [#allocation3], 512
    $region21: #{tpu_custom_call.1} parent=1 // pred_fallthru
      _
    // Predicated region
    $region22: #{tpu_custom_call.1} parent=1 // pred_check
      _
    $region23: #{tpu_custom_call.1} parent=1 // pred_check_branch
      %68 = sbr.rel (0) target = $region25
    $region24: #{tpu_custom_call.1} parent=1 // pred_region
      %69 = dma.done [#allocation6], 512
    $region25: #{tpu_custom_call.1} parent=1 // pred_fallthru
      _
    // Predicated region
    $region26: #{tpu_custom_call.1} parent=1 // pred_check
      _
    $region27: #{tpu_custom_call.1} parent=1 // pred_check_branch
      %71 = sbr.rel (0) target = $region29
    $region28: #{tpu_custom_call.1} parent=1 // pred_region
      %72 = dma.done [#allocation6], 512
    $region29: #{tpu_custom_call.1} parent=1 // pred_fallthru
      _
    // Predicated region
    $region30: #{tpu_custom_call.1} parent=1 // pred_check
      _
    $region31: #{tpu_custom_call.1} parent=1 // pred_check_branch
      %74 = sbr.rel (0) target = $region33
    $region32: #{tpu_custom_call.1} parent=1 // pred_region
      %75 = dma.done [#allocation9], 512
    $region33: #{tpu_custom_call.1} parent=1 // pred_fallthru
      _
    %v76 = vld [vmem:[#allocation2] sm:$0xff]
    %v77 = vld [vmem:[#allocation2 + $0x8] sm:$0xff]
    %v78 = vld [vmem:[#allocation2 + $0x10] sm:$0xff]
    %v79 = vld [vmem:[#allocation2 + $0x18] sm:$0xff]
    %v80 = vld [vmem:[#allocation5] sm:$0xff]
    %v81 = vld [vmem:[#allocation5 + $0x8] sm:$0xff]
    %v82 = vld [vmem:[#allocation5 + $0x10] sm:$0xff]
    %v83 = vld [vmem:[#allocation5 + $0x18] sm:$0xff]
    %v84 = vld [vmem:[#allocation7] sm:$0xff]
    %v85 = vld [vmem:[#allocation7 + $0x8] sm:$0xff]
    %v86 = vld [vmem:[#allocation7 + $0x10] sm:$0xff]
    %v87 = vld [vmem:[#allocation7 + $0x18] sm:$0xff]
    %vm88 = vcmask 130048
    %v90 = vsel %vm88, %v76, 0
    %v93 = vsel %vm88, %v80, 0
    %95 = vmatprep.subr.mxu0 0.0
    %96 = vmatpush1.xpose.msra.mxu0 %v93
    %97 = vmatprep.subr.mxu0 0.0
    %98 = vmatpush1.xpose.msra.mxu0 0.0
    %99 = vmatprep.subr.mxu0 0.0
    %100 = vmatpush1.xpose.msra.mxu0 0.0
    %101 = vmatprep.subr.mxu0 0.0
    %102 = vmatpush1.xpose.msra.mxu0 0.0
    %103 = vmatprep.subr.mxu0 0.0
    %104 = vmatpush1.xpose.msra.mxu0 0.0
    %105 = vmatprep.subr.mxu0 0.0
    %106 = vmatpush1.xpose.msra.mxu0 0.0
    %107 = vmatprep.subr.mxu0 0.0
    %108 = vmatpush1.xpose.msra.mxu0 0.0
    %109 = vmatprep.subr.mxu0 0.0
    %110 = vmatpush1.xpose.msra.mxu0 0.0
    %111 = vmatprep.subr.mxu0 0.0
    %112 = vmatpush1.xpose.msra.mxu0 0.0
    %113 = vmatprep.subr.mxu0 0.0
    %114 = vmatpush1.xpose.msra.mxu0 0.0
    %115 = vmatprep.subr.mxu0 0.0
    %116 = vmatpush1.xpose.msra.mxu0 0.0
    %117 = vmatprep.subr.mxu0 0.0
    %118 = vmatpush1.xpose.msra.mxu0 0.0
    %119 = vmatprep.subr.mxu0 0.0
    %120 = vmatpush1.xpose.msra.mxu0 0.0
    %121 = vmatprep.subr.mxu0 0.0
    %122 = vmatpush1.xpose.msra.mxu0 0.0
    %123 = vmatprep.subr.mxu0 0.0
    %124 = vmatpush1.xpose.msra.mxu0 0.0
    %125 = vmatprep.subr.mxu0 0.0
    %126 = vmatpush1.xpose.msra.mxu0 0.0
    %127 = vmatprep.subr.mxu0 0.0
    %128 = vmatpush1.xpose.msra.mxu0 0.0
    %129 = vmatprep.subr.mxu0 0.0
    %130 = vmatpush1.xpose.msra.mxu0 0.0
    %131 = vmatprep.subr.mxu0 0.0
    %132 = vmatpush1.xpose.msra.mxu0 0.0
    %133 = vmatprep.subr.mxu0 0.0
    %134 = vmatpush1.xpose.msra.mxu0 0.0
    %135 = vmatprep.subr.mxu0 0.0
    %136 = vmatpush1.xpose.msra.mxu0 0.0
    %137 = vmatprep.subr.mxu0 0.0
    %138 = vmatpush1.xpose.msra.mxu0 0.0
    %139 = vmatprep.subr.mxu0 0.0
    %140 = vmatpush1.xpose.msra.mxu0 0.0
    %141 = vmatprep.subr.mxu0 0.0
    %142 = vmatpush1.xpose.msra.mxu0 0.0
    %143 = vmatprep.subr.mxu0 0.0
    %144 = vmatpush1.xpose.msra.mxu0 0.0
    %145 = vmatprep.subr.mxu0 0.0
    %146 = vmatpush1.xpose.msra.mxu0 0.0
    %147 = vmatprep.subr.mxu0 0.0
    %148 = vmatpush1.xpose.msra.mxu0 0.0
    %149 = vmatprep.subr.mxu0 0.0
    %150 = vmatpush1.xpose.msra.mxu0 0.0
    %151 = vmatprep.subr.mxu0 0.0
    %152 = vmatpush1.xpose.msra.mxu0 0.0
    %153 = vmatprep.subr.mxu0 0.0
    %154 = vmatpush1.xpose.msra.mxu0 0.0
    %155 = vmatprep.subr.mxu0 0.0
    %156 = vmatpush1.xpose.msra.mxu0 0.0
    %157 = vmatprep.subr.mxu0 0.0
    %158 = vmatpush1.xpose.msra.mxu0 0.0
    %159 = vmatprep.mubr.f32.mxu0 0.0
    %160 = vmatmul.mubr.f32.gmra.mrb[0].mxu0 %v90
    %v161 = vpop.f32.mrb[0].mxu0
    %v162 = vadd.f32 0.0, %v161
    %v163 = vpop.f32.mrb[0].mxu0
    %164 = vdwg.mxu0
    %v166 = vsel %vm88, %v77, 0
    %v169 = vsel %vm88, %v81, 0
    %171 = vmatprep.subr.mxu0 0.0
    %172 = vmatpush1.xpose.msra.mxu0 %v169
    %173 = vmatprep.subr.mxu0 0.0
    %174 = vmatpush1.xpose.msra.mxu0 0.0
    %175 = vmatprep.subr.mxu0 0.0
    %176 = vmatpush1.xpose.msra.mxu0 0.0
    %177 = vmatprep.subr.mxu0 0.0
    %178 = vmatpush1.xpose.msra.mxu0 0.0
    %179 = vmatprep.subr.mxu0 0.0
    %180 = vmatpush1.xpose.msra.mxu0 0.0
    %181 = vmatprep.subr.mxu0 0.0
    %182 = vmatpush1.xpose.msra.mxu0 0.0
    %183 = vmatprep.subr.mxu0 0.0
    %184 = vmatpush1.xpose.msra.mxu0 0.0
    %185 = vmatprep.subr.mxu0 0.0
    %186 = vmatpush1.xpose.msra.mxu0 0.0
    %187 = vmatprep.subr.mxu0 0.0
    %188 = vmatpush1.xpose.msra.mxu0 0.0
    %189 = vmatprep.subr.mxu0 0.0
    %190 = vmatpush1.xpose.msra.mxu0 0.0
    %191 = vmatprep.subr.mxu0 0.0
    %192 = vmatpush1.xpose.msra.mxu0 0.0
    %193 = vmatprep.subr.mxu0 0.0
    %194 = vmatpush1.xpose.msra.mxu0 0.0
    %195 = vmatprep.subr.mxu0 0.0
    %196 = vmatpush1.xpose.msra.mxu0 0.0
    %197 = vmatprep.subr.mxu0 0.0
    %198 = vmatpush1.xpose.msra.mxu0 0.0
    %199 = vmatprep.subr.mxu0 0.0
    %200 = vmatpush1.xpose.msra.mxu0 0.0
    %201 = vmatprep.subr.mxu0 0.0
    %202 = vmatpush1.xpose.msra.mxu0 0.0
    %203 = vmatprep.subr.mxu0 0.0
    %204 = vmatpush1.xpose.msra.mxu0 0.0
    %205 = vmatprep.subr.mxu0 0.0
    %206 = vmatpush1.xpose.msra.mxu0 0.0
    %207 = vmatprep.subr.mxu0 0.0
    %208 = vmatpush1.xpose.msra.mxu0 0.0
    %209 = vmatprep.subr.mxu0 0.0
    %210 = vmatpush1.xpose.msra.mxu0 0.0
    %211 = vmatprep.subr.mxu0 0.0
    %212 = vmatpush1.xpose.msra.mxu0 0.0
    %213 = vmatprep.subr.mxu0 0.0
    %214 = vmatpush1.xpose.msra.mxu0 0.0
    %215 = vmatprep.subr.mxu0 0.0
    %216 = vmatpush1.xpose.msra.mxu0 0.0
    %217 = vmatprep.subr.mxu0 0.0
    %218 = vmatpush1.xpose.msra.mxu0 0.0
    %219 = vmatprep.subr.mxu0 0.0
    %220 = vmatpush1.xpose.msra.mxu0 0.0
    %221 = vmatprep.subr.mxu0 0.0
    %222 = vmatpush1.xpose.msra.mxu0 0.0
    %223 = vmatprep.subr.mxu0 0.0
    %224 = vmatpush1.xpose.msra.mxu0 0.0
    %225 = vmatprep.subr.mxu0 0.0
    %226 = vmatpush1.xpose.msra.mxu0 0.0
    %227 = vmatprep.subr.mxu0 0.0
    %228 = vmatpush1.xpose.msra.mxu0 0.0
    %229 = vmatprep.subr.mxu0 0.0
    %230 = vmatpush1.xpose.msra.mxu0 0.0
    %231 = vmatprep.subr.mxu0 0.0
    %232 = vmatpush1.xpose.msra.mxu0 0.0
    %233 = vmatprep.subr.mxu0 0.0
    %234 = vmatpush1.xpose.msra.mxu0 0.0
    %235 = vmatprep.mubr.f32.mxu0 0.0
    %236 = vmatmul.mubr.f32.gmra.mrb[0].mxu0 %v166
    %v237 = vpop.f32.mrb[0].mxu0
    %v238 = vadd.f32 0.0, %v237
    %v239 = vpop.f32.mrb[0].mxu0
    %240 = vdwg.mxu0
    %v242 = vsel %vm88, %v78, 0
    %v245 = vsel %vm88, %v82, 0
    %247 = vmatprep.subr.mxu0 0.0
    %248 = vmatpush1.xpose.msra.mxu0 %v245
    %249 = vmatprep.subr.mxu0 0.0
    %250 = vmatpush1.xpose.msra.mxu0 0.0
    %251 = vmatprep.subr.mxu0 0.0
    %252 = vmatpush1.xpose.msra.mxu0 0.0
    %253 = vmatprep.subr.mxu0 0.0
    %254 = vmatpush1.xpose.msra.mxu0 0.0
    %255 = vmatprep.subr.mxu0 0.0
    %256 = vmatpush1.xpose.msra.mxu0 0.0
    %257 = vmatprep.subr.mxu0 0.0
    %258 = vmatpush1.xpose.msra.mxu0 0.0
    %259 = vmatprep.subr.mxu0 0.0
    %260 = vmatpush1.xpose.msra.mxu0 0.0
    %261 = vmatprep.subr.mxu0 0.0
    %262 = vmatpush1.xpose.msra.mxu0 0.0
    %263 = vmatprep.subr.mxu0 0.0
    %264 = vmatpush1.xpose.msra.mxu0 0.0
    %265 = vmatprep.subr.mxu0 0.0
    %266 = vmatpush1.xpose.msra.mxu0 0.0
    %267 = vmatprep.subr.mxu0 0.0
    %268 = vmatpush1.xpose.msra.mxu0 0.0
    %269 = vmatprep.subr.mxu0 0.0
    %270 = vmatpush1.xpose.msra.mxu0 0.0
    %271 = vmatprep.subr.mxu0 0.0
    %272 = vmatpush1.xpose.msra.mxu0 0.0
    %273 = vmatprep.subr.mxu0 0.0
    %274 = vmatpush1.xpose.msra.mxu0 0.0
    %275 = vmatprep.subr.mxu0 0.0
    %276 = vmatpush1.xpose.msra.mxu0 0.0
    %277 = vmatprep.subr.mxu0 0.0
    %278 = vmatpush1.xpose.msra.mxu0 0.0
    %279 = vmatprep.subr.mxu0 0.0
    %280 = vmatpush1.xpose.msra.mxu0 0.0
    %281 = vmatprep.subr.mxu0 0.0
    %282 = vmatpush1.xpose.msra.mxu0 0.0
    %283 = vmatprep.subr.mxu0 0.0
    %284 = vmatpush1.xpose.msra.mxu0 0.0
    %285 = vmatprep.subr.mxu0 0.0
    %286 = vmatpush1.xpose.msra.mxu0 0.0
    %287 = vmatprep.subr.mxu0 0.0
    %288 = vmatpush1.xpose.msra.mxu0 0.0
    %289 = vmatprep.subr.mxu0 0.0
    %290 = vmatpush1.xpose.msra.mxu0 0.0
    %291 = vmatprep.subr.mxu0 0.0
    %292 = vmatpush1.xpose.msra.mxu0 0.0
    %293 = vmatprep.subr.mxu0 0.0
    %294 = vmatpush1.xpose.msra.mxu0 0.0
    %295 = vmatprep.subr.mxu0 0.0
    %296 = vmatpush1.xpose.msra.mxu0 0.0
    %297 = vmatprep.subr.mxu0 0.0
    %298 = vmatpush1.xpose.msra.mxu0 0.0
    %299 = vmatprep.subr.mxu0 0.0
    %300 = vmatpush1.xpose.msra.mxu0 0.0
    %301 = vmatprep.subr.mxu0 0.0
    %302 = vmatpush1.xpose.msra.mxu0 0.0
    %303 = vmatprep.subr.mxu0 0.0
    %304 = vmatpush1.xpose.msra.mxu0 0.0
    %305 = vmatprep.subr.mxu0 0.0
    %306 = vmatpush1.xpose.msra.mxu0 0.0
    %307 = vmatprep.subr.mxu0 0.0
    %308 = vmatpush1.xpose.msra.mxu0 0.0
    %309 = vmatprep.subr.mxu0 0.0
    %310 = vmatpush1.xpose.msra.mxu0 0.0
    %311 = vmatprep.mubr.f32.mxu0 0.0
    %312 = vmatmul.mubr.f32.gmra.mrb[0].mxu0 %v242
    %v313 = vpop.f32.mrb[0].mxu0
    %v314 = vadd.f32 0.0, %v313
    %v315 = vpop.f32.mrb[0].mxu0
    %316 = vdwg.mxu0
    %v318 = vsel %vm88, %v79, 0
    %v321 = vsel %vm88, %v83, 0
    %323 = vmatprep.subr.mxu0 0.0
    %324 = vmatpush1.xpose.msra.mxu0 %v321
    %325 = vmatprep.subr.mxu0 0.0
    %326 = vmatpush1.xpose.msra.mxu0 0.0
    %327 = vmatprep.subr.mxu0 0.0
    %328 = vmatpush1.xpose.msra.mxu0 0.0
    %329 = vmatprep.subr.mxu0 0.0
    %330 = vmatpush1.xpose.msra.mxu0 0.0
    %331 = vmatprep.subr.mxu0 0.0
    %332 = vmatpush1.xpose.msra.mxu0 0.0
    %333 = vmatprep.subr.mxu0 0.0
    %334 = vmatpush1.xpose.msra.mxu0 0.0
    %335 = vmatprep.subr.mxu0 0.0
    %336 = vmatpush1.xpose.msra.mxu0 0.0
    %337 = vmatprep.subr.mxu0 0.0
    %338 = vmatpush1.xpose.msra.mxu0 0.0
    %339 = vmatprep.subr.mxu0 0.0
    %340 = vmatpush1.xpose.msra.mxu0 0.0
    %341 = vmatprep.subr.mxu0 0.0
    %342 = vmatpush1.xpose.msra.mxu0 0.0
    %343 = vmatprep.subr.mxu0 0.0
    %344 = vmatpush1.xpose.msra.mxu0 0.0
    %345 = vmatprep.subr.mxu0 0.0
    %346 = vmatpush1.xpose.msra.mxu0 0.0
    %347 = vmatprep.subr.mxu0 0.0
    %348 = vmatpush1.xpose.msra.mxu0 0.0
    %349 = vmatprep.subr.mxu0 0.0
    %350 = vmatpush1.xpose.msra.mxu0 0.0
    %351 = vmatprep.subr.mxu0 0.0
    %352 = vmatpush1.xpose.msra.mxu0 0.0
    %353 = vmatprep.subr.mxu0 0.0
    %354 = vmatpush1.xpose.msra.mxu0 0.0
    %355 = vmatprep.subr.mxu0 0.0
    %356 = vmatpush1.xpose.msra.mxu0 0.0
    %357 = vmatprep.subr.mxu0 0.0
    %358 = vmatpush1.xpose.msra.mxu0 0.0
    %359 = vmatprep.subr.mxu0 0.0
    %360 = vmatpush1.xpose.msra.mxu0 0.0
    %361 = vmatprep.subr.mxu0 0.0
    %362 = vmatpush1.xpose.msra.mxu0 0.0
    %363 = vmatprep.subr.mxu0 0.0
    %364 = vmatpush1.xpose.msra.mxu0 0.0
    %365 = vmatprep.subr.mxu0 0.0
    %366 = vmatpush1.xpose.msra.mxu0 0.0
    %367 = vmatprep.subr.mxu0 0.0
    %368 = vmatpush1.xpose.msra.mxu0 0.0
    %369 = vmatprep.subr.mxu0 0.0
    %370 = vmatpush1.xpose.msra.mxu0 0.0
    %371 = vmatprep.subr.mxu0 0.0
    %372 = vmatpush1.xpose.msra.mxu0 0.0
    %373 = vmatprep.subr.mxu0 0.0
    %374 = vmatpush1.xpose.msra.mxu0 0.0
    %375 = vmatprep.subr.mxu0 0.0
    %376 = vmatpush1.xpose.msra.mxu0 0.0
    %377 = vmatprep.subr.mxu0 0.0
    %378 = vmatpush1.xpose.msra.mxu0 0.0
    %379 = vmatprep.subr.mxu0 0.0
    %380 = vmatpush1.xpose.msra.mxu0 0.0
    %381 = vmatprep.subr.mxu0 0.0
    %382 = vmatpush1.xpose.msra.mxu0 0.0
    %383 = vmatprep.subr.mxu0 0.0
    %384 = vmatpush1.xpose.msra.mxu0 0.0
    %385 = vmatprep.subr.mxu0 0.0
    %386 = vmatpush1.xpose.msra.mxu0 0.0
    %387 = vmatprep.mubr.f32.mxu0 0.0
    %388 = vmatmul.mubr.f32.gmra.mrb[0].mxu0 %v318
    %v389 = vpop.f32.mrb[0].mxu0
    %v390 = vadd.f32 0.0, %v389
    %v391 = vpop.f32.mrb[0].mxu0
    %392 = vdwg.mxu0
    %v393 = vmul.f32 %v162, 0.25
    %v394 = vmul.f32 %v238, 0.25
    %v395 = vmul.f32 %v314, 0.25
    %v396 = vmul.f32 %v390, 0.25
    %v397 = vld [vmem:[#allocation8] sm:$0xff]
    %v398 = vld [vmem:[#allocation8 + $0x8] sm:$0xff]
    %v399 = vld [vmem:[#allocation8 + $0x10] sm:$0xff]
    %v400 = vld [vmem:[#allocation8 + $0x18] sm:$0xff]
    %vm401 = vcmp.ne.s32.totalorder %v397, 0
    %vm402 = vcmp.ne.s32.totalorder %v398, 0
    %vm403 = vcmp.ne.s32.totalorder %v399, 0
    %vm404 = vcmp.ne.s32.totalorder %v400, 0
    %v405 = vsel %vm401, -1e+09, %v393
    %v406 = vsel %vm402, -1e+09, %v394
    %v407 = vsel %vm403, -1e+09, %v395
    %v408 = vsel %vm404, -1e+09, %v396
    %vm409 = vcmask 64512
    %v410 = vsel %vm409, %v405, -inf
    %411 = vmax.xlane.f32.xlu0 %v410
    %v412 = vpop.xlane.xlu0 %411
    %v413 = vsel %vm409, %v406, -inf
    %414 = vmax.xlane.f32.xlu0 %v413
    %v415 = vpop.xlane.xlu0 %414
    %v416 = vsel %vm409, %v407, -inf
    %417 = vmax.xlane.f32.xlu0 %v416
    %v418 = vpop.xlane.xlu0 %417
    %v419 = vsel %vm409, %v408, -inf
    %420 = vmax.xlane.f32.xlu0 %v419
    %v421 = vpop.xlane.xlu0 %420
    %v422 = vsub.f32 %v405, %v412
    %v423 = vsub.f32 %v406, %v415
    %v424 = vsub.f32 %v407, %v418
    %v425 = vsub.f32 %v408, %v421
    %v426 = vmul.f32 %v422, 1.442695
    %v427 = vpow.pop %v426
    %v428 = vmul.f32 %v423, 1.442695
    %v429 = vpow.pop %v428
    %v430 = vmul.f32 %v424, 1.442695
    %v431 = vpow.pop %v430
    %v432 = vmul.f32 %v425, 1.442695
    %v433 = vpow.pop %v432
    %v434 = vsel %vm409, %v427, 0.0
    %435 = vadd.xlane.f32.xlu0 %v434
    %v436 = vpop.xlane.xlu0 %435
    %v437 = vsel %vm409, %v429, 0.0
    %438 = vadd.xlane.f32.xlu0 %v437
    %v439 = vpop.xlane.xlu0 %438
    %v440 = vsel %vm409, %v431, 0.0
    %441 = vadd.xlane.f32.xlu0 %v440
    %v442 = vpop.xlane.xlu0 %441
    %v443 = vsel %vm409, %v433, 0.0
    %444 = vadd.xlane.f32.xlu0 %v443
    %v445 = vpop.xlane.xlu0 %444
    %v446 = vrcp.pop %v436
    %v447 = vmul.f32 %v427, %v446
    %v448 = vrcp.pop %v439
    %v449 = vmul.f32 %v429, %v448
    %v450 = vrcp.pop %v442
    %v451 = vmul.f32 %v431, %v450
    %v452 = vrcp.pop %v445
    %v453 = vmul.f32 %v433, %v452
    %v455 = vsel %vm409, %v447, 0
    %457 = vmatprep.subr.mxu0 0.0
    %458 = vmatpush1.msra.mxu0 %v84
    %459 = vmatprep.subr.mxu0 0.0
    %460 = vmatpush1.msra.mxu0 0.0
    %461 = vmatprep.subr.mxu0 0.0
    %462 = vmatpush1.msra.mxu0 0.0
    %463 = vmatprep.subr.mxu0 0.0
    %464 = vmatpush1.msra.mxu0 0.0
    %465 = vmatprep.subr.mxu0 0.0
    %466 = vmatpush1.msra.mxu0 0.0
    %467 = vmatprep.subr.mxu0 0.0
    %468 = vmatpush1.msra.mxu0 0.0
    %469 = vmatprep.subr.mxu0 0.0
    %470 = vmatpush1.msra.mxu0 0.0
    %471 = vmatprep.subr.mxu0 0.0
    %472 = vmatpush1.msra.mxu0 0.0
    %473 = vmatprep.subr.mxu0 0.0
    %474 = vmatpush1.msra.mxu0 0.0
    %475 = vmatprep.subr.mxu0 0.0
    %476 = vmatpush1.msra.mxu0 0.0
    %477 = vmatprep.subr.mxu0 0.0
    %478 = vmatpush1.msra.mxu0 0.0
    %479 = vmatprep.subr.mxu0 0.0
    %480 = vmatpush1.msra.mxu0 0.0
    %481 = vmatprep.subr.mxu0 0.0
    %482 = vmatpush1.msra.mxu0 0.0
    %483 = vmatprep.subr.mxu0 0.0
    %484 = vmatpush1.msra.mxu0 0.0
    %485 = vmatprep.subr.mxu0 0.0
    %486 = vmatpush1.msra.mxu0 0.0
    %487 = vmatprep.subr.mxu0 0.0
    %488 = vmatpush1.msra.mxu0 0.0
    %489 = vmatprep.subr.mxu0 0.0
    %490 = vmatpush1.msra.mxu0 0.0
    %491 = vmatprep.subr.mxu0 0.0
    %492 = vmatpush1.msra.mxu0 0.0
    %493 = vmatprep.subr.mxu0 0.0
    %494 = vmatpush1.msra.mxu0 0.0
    %495 = vmatprep.subr.mxu0 0.0
    %496 = vmatpush1.msra.mxu0 0.0
    %497 = vmatprep.subr.mxu0 0.0
    %498 = vmatpush1.msra.mxu0 0.0
    %499 = vmatprep.subr.mxu0 0.0
    %500 = vmatpush1.msra.mxu0 0.0
    %501 = vmatprep.subr.mxu0 0.0
    %502 = vmatpush1.msra.mxu0 0.0
    %503 = vmatprep.subr.mxu0 0.0
    %504 = vmatpush1.msra.mxu0 0.0
    %505 = vmatprep.subr.mxu0 0.0
    %506 = vmatpush1.msra.mxu0 0.0
    %507 = vmatprep.subr.mxu0 0.0
    %508 = vmatpush1.msra.mxu0 0.0
    %509 = vmatprep.subr.mxu0 0.0
    %510 = vmatpush1.msra.mxu0 0.0
    %511 = vmatprep.subr.mxu0 0.0
    %512 = vmatpush1.msra.mxu0 0.0
    %513 = vmatprep.subr.mxu0 0.0
    %514 = vmatpush1.msra.mxu0 0.0
    %515 = vmatprep.subr.mxu0 0.0
    %516 = vmatpush1.msra.mxu0 0.0
    %517 = vmatprep.subr.mxu0 0.0
    %518 = vmatpush1.msra.mxu0 0.0
    %519 = vmatprep.subr.mxu0 0.0
    %520 = vmatpush1.msra.mxu0 0.0
    %521 = vmatprep.mubr.f32.mxu0 0.0
    %522 = vmatmul.mubr.f32.gmra.mrb[0].mxu0 %v455
    %v523 = vpop.f32.mrb[0].mxu0
    %v524 = vadd.f32 0.0, %v523
    %v525 = vpop.f32.mrb[0].mxu0
    %526 = vdwg.mxu0
    %v528 = vsel %vm409, %v449, 0
    %530 = vmatprep.subr.mxu0 0.0
    %531 = vmatpush1.msra.mxu0 %v85
    %532 = vmatprep.subr.mxu0 0.0
    %533 = vmatpush1.msra.mxu0 0.0
    %534 = vmatprep.subr.mxu0 0.0
    %535 = vmatpush1.msra.mxu0 0.0
    %536 = vmatprep.subr.mxu0 0.0
    %537 = vmatpush1.msra.mxu0 0.0
    %538 = vmatprep.subr.mxu0 0.0
    %539 = vmatpush1.msra.mxu0 0.0
    %540 = vmatprep.subr.mxu0 0.0
    %541 = vmatpush1.msra.mxu0 0.0
    %542 = vmatprep.subr.mxu0 0.0
    %543 = vmatpush1.msra.mxu0 0.0
    %544 = vmatprep.subr.mxu0 0.0
    %545 = vmatpush1.msra.mxu0 0.0
    %546 = vmatprep.subr.mxu0 0.0
    %547 = vmatpush1.msra.mxu0 0.0
    %548 = vmatprep.subr.mxu0 0.0
    %549 = vmatpush1.msra.mxu0 0.0
    %550 = vmatprep.subr.mxu0 0.0
    %551 = vmatpush1.msra.mxu0 0.0
    %552 = vmatprep.subr.mxu0 0.0
    %553 = vmatpush1.msra.mxu0 0.0
    %554 = vmatprep.subr.mxu0 0.0
    %555 = vmatpush1.msra.mxu0 0.0
    %556 = vmatprep.subr.mxu0 0.0
    %557 = vmatpush1.msra.mxu0 0.0
    %558 = vmatprep.subr.mxu0 0.0
    %559 = vmatpush1.msra.mxu0 0.0
    %560 = vmatprep.subr.mxu0 0.0
    %561 = vmatpush1.msra.mxu0 0.0
    %562 = vmatprep.subr.mxu0 0.0
    %563 = vmatpush1.msra.mxu0 0.0
    %564 = vmatprep.subr.mxu0 0.0
    %565 = vmatpush1.msra.mxu0 0.0
    %566 = vmatprep.subr.mxu0 0.0
    %567 = vmatpush1.msra.mxu0 0.0
    %568 = vmatprep.subr.mxu0 0.0
    %569 = vmatpush1.msra.mxu0 0.0
    %570 = vmatprep.subr.mxu0 0.0
    %571 = vmatpush1.msra.mxu0 0.0
    %572 = vmatprep.subr.mxu0 0.0
    %573 = vmatpush1.msra.mxu0 0.0
    %574 = vmatprep.subr.mxu0 0.0
    %575 = vmatpush1.msra.mxu0 0.0
    %576 = vmatprep.subr.mxu0 0.0
    %577 = vmatpush1.msra.mxu0 0.0
    %578 = vmatprep.subr.mxu0 0.0
    %579 = vmatpush1.msra.mxu0 0.0
    %580 = vmatprep.subr.mxu0 0.0
    %581 = vmatpush1.msra.mxu0 0.0
    %582 = vmatprep.subr.mxu0 0.0
    %583 = vmatpush1.msra.mxu0 0.0
    %584 = vmatprep.subr.mxu0 0.0
    %585 = vmatpush1.msra.mxu0 0.0
    %586 = vmatprep.subr.mxu0 0.0
    %587 = vmatpush1.msra.mxu0 0.0
    %588 = vmatprep.subr.mxu0 0.0
    %589 = vmatpush1.msra.mxu0 0.0
    %590 = vmatprep.subr.mxu0 0.0
    %591 = vmatpush1.msra.mxu0 0.0
    %592 = vmatprep.subr.mxu0 0.0
    %593 = vmatpush1.msra.mxu0 0.0
    %594 = vmatprep.mubr.f32.mxu0 0.0
    %595 = vmatmul.mubr.f32.gmra.mrb[0].mxu0 %v528
    %v596 = vpop.f32.mrb[0].mxu0
    %v597 = vadd.f32 0.0, %v596
    %v598 = vpop.f32.mrb[0].mxu0
    %599 = vdwg.mxu0
    %v601 = vsel %vm409, %v451, 0
    %603 = vmatprep.subr.mxu0 0.0
    %604 = vmatpush1.msra.mxu0 %v86
    %605 = vmatprep.subr.mxu0 0.0
    %606 = vmatpush1.msra.mxu0 0.0
    %607 = vmatprep.subr.mxu0 0.0
    %608 = vmatpush1.msra.mxu0 0.0
    %609 = vmatprep.subr.mxu0 0.0
    %610 = vmatpush1.msra.mxu0 0.0
    %611 = vmatprep.subr.mxu0 0.0
    %612 = vmatpush1.msra.mxu0 0.0
    %613 = vmatprep.subr.mxu0 0.0
    %614 = vmatpush1.msra.mxu0 0.0
    %615 = vmatprep.subr.mxu0 0.0
    %616 = vmatpush1.msra.mxu0 0.0
    %617 = vmatprep.subr.mxu0 0.0
    %618 = vmatpush1.msra.mxu0 0.0
    %619 = vmatprep.subr.mxu0 0.0
    %620 = vmatpush1.msra.mxu0 0.0
    %621 = vmatprep.subr.mxu0 0.0
    %622 = vmatpush1.msra.mxu0 0.0
    %623 = vmatprep.subr.mxu0 0.0
    %624 = vmatpush1.msra.mxu0 0.0
    %625 = vmatprep.subr.mxu0 0.0
    %626 = vmatpush1.msra.mxu0 0.0
    %627 = vmatprep.subr.mxu0 0.0
    %628 = vmatpush1.msra.mxu0 0.0
    %629 = vmatprep.subr.mxu0 0.0
    %630 = vmatpush1.msra.mxu0 0.0
    %631 = vmatprep.subr.mxu0 0.0
    %632 = vmatpush1.msra.mxu0 0.0
    %633 = vmatprep.subr.mxu0 0.0
    %634 = vmatpush1.msra.mxu0 0.0
    %635 = vmatprep.subr.mxu0 0.0
    %636 = vmatpush1.msra.mxu0 0.0
    %637 = vmatprep.subr.mxu0 0.0
    %638 = vmatpush1.msra.mxu0 0.0
    %639 = vmatprep.subr.mxu0 0.0
    %640 = vmatpush1.msra.mxu0 0.0
    %641 = vmatprep.subr.mxu0 0.0
    %642 = vmatpush1.msra.mxu0 0.0
    %643 = vmatprep.subr.mxu0 0.0
    %644 = vmatpush1.msra.mxu0 0.0
    %645 = vmatprep.subr.mxu0 0.0
    %646 = vmatpush1.msra.mxu0 0.0
    %647 = vmatprep.subr.mxu0 0.0
    %648 = vmatpush1.msra.mxu0 0.0
    %649 = vmatprep.subr.mxu0 0.0
    %650 = vmatpush1.msra.mxu0 0.0
    %651 = vmatprep.subr.mxu0 0.0
    %652 = vmatpush1.msra.mxu0 0.0
    %653 = vmatprep.subr.mxu0 0.0
    %654 = vmatpush1.msra.mxu0 0.0
    %655 = vmatprep.subr.mxu0 0.0
    %656 = vmatpush1.msra.mxu0 0.0
    %657 = vmatprep.subr.mxu0 0.0
    %658 = vmatpush1.msra.mxu0 0.0
    %659 = vmatprep.subr.mxu0 0.0
    %660 = vmatpush1.msra.mxu0 0.0
    %661 = vmatprep.subr.mxu0 0.0
    %662 = vmatpush1.msra.mxu0 0.0
    %663 = vmatprep.subr.mxu0 0.0
    %664 = vmatpush1.msra.mxu0 0.0
    %665 = vmatprep.subr.mxu0 0.0
    %666 = vmatpush1.msra.mxu0 0.0
    %667 = vmatprep.mubr.f32.mxu0 0.0
    %668 = vmatmul.mubr.f32.gmra.mrb[0].mxu0 %v601
    %v669 = vpop.f32.mrb[0].mxu0
    %v670 = vadd.f32 0.0, %v669
    %v671 = vpop.f32.mrb[0].mxu0
    %672 = vdwg.mxu0
    %v674 = vsel %vm409, %v453, 0
    %676 = vmatprep.subr.mxu0 0.0
    %677 = vmatpush1.msra.mxu0 %v87
    %678 = vmatprep.subr.mxu0 0.0
    %679 = vmatpush1.msra.mxu0 0.0
    %680 = vmatprep.subr.mxu0 0.0
    %681 = vmatpush1.msra.mxu0 0.0
    %682 = vmatprep.subr.mxu0 0.0
    %683 = vmatpush1.msra.mxu0 0.0
    %684 = vmatprep.subr.mxu0 0.0
    %685 = vmatpush1.msra.mxu0 0.0
    %686 = vmatprep.subr.mxu0 0.0
    %687 = vmatpush1.msra.mxu0 0.0
    %688 = vmatprep.subr.mxu0 0.0
    %689 = vmatpush1.msra.mxu0 0.0
    %690 = vmatprep.subr.mxu0 0.0
    %691 = vmatpush1.msra.mxu0 0.0
    %692 = vmatprep.subr.mxu0 0.0
    %693 = vmatpush1.msra.mxu0 0.0
    %694 = vmatprep.subr.mxu0 0.0
    %695 = vmatpush1.msra.mxu0 0.0
    %696 = vmatprep.subr.mxu0 0.0
    %697 = vmatpush1.msra.mxu0 0.0
    %698 = vmatprep.subr.mxu0 0.0
    %699 = vmatpush1.msra.mxu0 0.0
    %700 = vmatprep.subr.mxu0 0.0
    %701 = vmatpush1.msra.mxu0 0.0
    %702 = vmatprep.subr.mxu0 0.0
    %703 = vmatpush1.msra.mxu0 0.0
    %704 = vmatprep.subr.mxu0 0.0
    %705 = vmatpush1.msra.mxu0 0.0
    %706 = vmatprep.subr.mxu0 0.0
    %707 = vmatpush1.msra.mxu0 0.0
    %708 = vmatprep.subr.mxu0 0.0
    %709 = vmatpush1.msra.mxu0 0.0
    %710 = vmatprep.subr.mxu0 0.0
    %711 = vmatpush1.msra.mxu0 0.0
    %712 = vmatprep.subr.mxu0 0.0
    %713 = vmatpush1.msra.mxu0 0.0
    %714 = vmatprep.subr.mxu0 0.0
    %715 = vmatpush1.msra.mxu0 0.0
    %716 = vmatprep.subr.mxu0 0.0
    %717 = vmatpush1.msra.mxu0 0.0
    %718 = vmatprep.subr.mxu0 0.0
    %719 = vmatpush1.msra.mxu0 0.0
    %720 = vmatprep.subr.mxu0 0.0
    %721 = vmatpush1.msra.mxu0 0.0
    %722 = vmatprep.subr.mxu0 0.0
    %723 = vmatpush1.msra.mxu0 0.0
    %724 = vmatprep.subr.mxu0 0.0
    %725 = vmatpush1.msra.mxu0 0.0
    %726 = vmatprep.subr.mxu0 0.0
    %727 = vmatpush1.msra.mxu0 0.0
    %728 = vmatprep.subr.mxu0 0.0
    %729 = vmatpush1.msra.mxu0 0.0
    %730 = vmatprep.subr.mxu0 0.0
    %731 = vmatpush1.msra.mxu0 0.0
    %732 = vmatprep.subr.mxu0 0.0
    %733 = vmatpush1.msra.mxu0 0.0
    %734 = vmatprep.subr.mxu0 0.0
    %735 = vmatpush1.msra.mxu0 0.0
    %736 = vmatprep.subr.mxu0 0.0
    %737 = vmatpush1.msra.mxu0 0.0
    %738 = vmatprep.subr.mxu0 0.0
    %739 = vmatpush1.msra.mxu0 0.0
    %740 = vmatprep.mubr.f32.mxu0 0.0
    %741 = vmatmul.mubr.f32.gmra.mrb[0].mxu0 %v674
    %v742 = vpop.f32.mrb[0].mxu0
    %v743 = vadd.f32 0.0, %v742
    %v744 = vpop.f32.mrb[0].mxu0
    %745 = vdwg.mxu0
    %746 = vst.msk [vmem:[#allocation10] sm:$0xff] %vm88, %v524
    %747 = vst.msk [vmem:[#allocation10 + $0x8] sm:$0xff] %vm88, %v597
    %748 = vst.msk [vmem:[#allocation10 + $0x10] sm:$0xff] %vm88, %v670
    %749 = vst.msk [vmem:[#allocation10 + $0x18] sm:$0xff] %vm88, %v743
    %750 = vst.msk [vmem:[#allocation11] sm:$0xff] %vm409, %v447
    %751 = vst.msk [vmem:[#allocation11 + $0x8] sm:$0xff] %vm409, %v449
    %752 = vst.msk [vmem:[#allocation11 + $0x10] sm:$0xff] %vm409, %v451
    %753 = vst.msk [vmem:[#allocation11 + $0x18] sm:$0xff] %vm409, %v453
    // Predicated region
    $region34: #{tpu_custom_call.1} parent=1 // pred_check
      _
    $region35: #{tpu_custom_call.1} parent=1 // pred_check_branch
      %755 = sbr.rel (0) target = $region37
    $region36: #{tpu_custom_call.1} parent=1 // pred_region
      %s757 = ssub.s32 512, 512
      %758 = vsyncadd [#allocation4], %s757
      %s759 = sshll.u32 [#allocation10], 4
      %s760 = int_to_ptr.vmem [resolvable:$true] %s759
      %765 = dma.vmem_to_hbm [thread:$0]  %s760, 512, %s4, [#allocation4], 128, 128, 8
    $region37: #{tpu_custom_call.1} parent=1 // pred_fallthru
      _
    // Predicated region
    $region38: #{tpu_custom_call.1} parent=1 // pred_check
      _
    $region39: #{tpu_custom_call.1} parent=1 // pred_check_branch
      %767 = sbr.rel (0) target = $region41
    $region40: #{tpu_custom_call.1} parent=1 // pred_region
      %s769 = ssub.s32 512, 512
      %770 = vsyncadd [#allocation12], %s769
      %s771 = sshll.u32 [#allocation11], 4
      %s772 = int_to_ptr.vmem [resolvable:$true] %s771
      %777 = dma.vmem_to_hbm [thread:$0]  %s772, 512, %s5, [#allocation12], 128, 128, 8
    $region41: #{tpu_custom_call.1} parent=1 // pred_fallthru
      _
    // Predicated region
    $region42: #{tpu_custom_call.1} parent=1 // pred_check
      _
    $region43: #{tpu_custom_call.1} parent=1 // pred_check_branch
      %779 = sbr.rel (0) target = $region45
    $region44: #{tpu_custom_call.1} parent=1 // pred_region
      %780 = dma.done [#allocation4], 512
    $region45: #{tpu_custom_call.1} parent=1 // pred_fallthru
      _
    // Predicated region
    $region46: #{tpu_custom_call.1} parent=1 // pred_check
      _
    $region47: #{tpu_custom_call.1} parent=1 // pred_check_branch
      %782 = sbr.rel (0) target = $region49
    $region48: #{tpu_custom_call.1} parent=1 // pred_region
      %783 = dma.done [#allocation12], 512
    $region49: #{tpu_custom_call.1} parent=1 // pred_fallthru
      _
    %784 = vsyncpa [#allocation3], 1
    %785 = vsyncpa [#allocation6], 1
    %786 = vsyncpa [#allocation9], 1
    %787 = vsyncpa [#allocation4], 1
    %788 = vsyncpa [#allocation12], 1

</llo_original>
